<compile_context>
chip_gen: v7x
topology: tpu7x:2x2x1
jax: 0.10.0
libtpu: 0.0.40
codegen_flags: <defaults>
</compile_context>

<pallas_src>
import jax
import jax.numpy as jnp
from jax.experimental import pallas as pl
from jax.experimental.pallas import tpu as pltpu


def _round_up(a, b):
    return (a + b - 1) // b * b


def _pack_factor(f_l):
    """Pixels packed per 128-lane row so the x/out stream is lane-dense."""
    return 128 // f_l if 128 % f_l == 0 else 1


def _choose_tile(rows, cap=2048):
    """Row tile for the dense (rows, ~128) slabs: largest multiple-of-8 divisor
    of `rows` that is <= cap (so no pad / no out[:m] slice); prefers an even
    grid length (v7x megacore) when that keeps tiles >= 256 rows.
    Returns None when no clean divisor exists (caller pads as a fallback)."""
    cands = [d for d in range(8, min(rows, cap) + 1, 8) if rows % d == 0]
    if rows <= cap:
        cands.append(rows)           # single full-extent tile is always legal
    if not cands:
        return None
    tile = max(cands)
    even = [d for d in cands if (rows // d) % 2 == 0 and d >= 256]
    if even:
        tile = max(even)
    return tile


# --------------------------------------------------------------------------
# Pallas kernel: the entire AttentionBlock for one tile of lane-dense rows.
# --------------------------------------------------------------------------
def _attention_block_kernel(g_ref, x_ref, wg_ref, wx_ref, shift_ref, s_ref,
                            o_ref):
    xf = x_ref[...]                                    # (tile, pack*F_l)  f32
    # Two folded 1x1 convs (+BN scale) as block-diagonal bf16 MXU matmuls.
    h = jnp.dot(g_ref[...].astype(jnp.bfloat16), wg_ref[...],
                preferred_element_type=jnp.float32)
    h = h + jnp.dot(xf.astype(jnp.bfloat16), wx_ref[...],
                    preferred_element_type=jnp.float32)
    h = jnp.maximum(h + shift_ref[...], 0.0)           # (tile, pack*nip)
    # psi 1x1 conv (+BN, bias via the constant-1 spare channel) AND the
    # broadcast of the per-pixel logit across that pixel's F_l lanes, as one
    # f32 matmul against the scatter matrix S -> fully lane-dense epilogue.
    logit = jnp.dot(h, s_ref[...], preferred_element_type=jnp.float32)
    o_ref[...] = (xf * jax.nn.sigmoid(logit)).astype(o_ref.dtype)


# --------------------------------------------------------------------------
# Wrapper
# --------------------------------------------------------------------------
def attention_block_forward(g_nhwc, x_nhwc, p):
    """g: (N,H,W,F_g) f32, x: (N,H,W,F_l) f32 -> (N,H,W,F_l) f32."""
    n, h, w, fg = g_nhwc.shape
    fl = x_nhwc.shape[-1]
    pack = _pack_factor(fl)
    m = n * h * w
    # TODO(synk): ragged m (m % pack != 0) would need a padded tail tile; it
    # cannot happen for typical even-sized feature maps.
    assert m % pack == 0, "N*H*W must be divisible by the lane pack factor"

    rows = m // pack
    cg = pack * fg                     # lanes per g row
    cx = pack * fl                     # lanes per x/out row (multiple of 128)
    cn = p["shift"].shape[-1]          # pack * nip (hidden lanes)

    # Free, layout-identical reshapes (row-major contiguous) -> lane-dense.
    g2 = g_nhwc.reshape(rows, cg)
    x2 = x_nhwc.reshape(rows, cx)

    tile = _choose_tile(rows)
    rows_p = rows
    if tile is None:                   # rare fallback: awkward row count
        tile = min(rows, 2048)
        rows_p = _round_up(rows, tile)
        g2 = jnp.pad(g2, ((0, rows_p - rows), (0, 0)))
        x2 = jnp.pad(x2, ((0, rows_p - rows), (0, 0)))
    grid = (rows_p // tile,)

    w_bytes = (p["wg"].size + p["wx"].size) * 2 + (p["shift"].size + p["s"].size) * 4
    cost = pl.CostEstimate(
        flops=2 * rows_p * cn * (cg + 2 * cx),
        transcendentals=rows_p * cx,
        bytes_accessed=rows_p * (cg + 2 * cx) * 4 + int(w_bytes),
    )

    out = pl.pallas_call(
        _attention_block_kernel,
        out_shape=jax.ShapeDtypeStruct((rows_p, cx), jnp.float32),
        grid=grid,
        in_specs=[
            pl.BlockSpec((tile, cg), lambda i: (i, 0)),   # g rows   (stream)
            pl.BlockSpec((tile, cx), lambda i: (i, 0)),   # x rows   (stream)
            pl.BlockSpec((cg, cn), lambda i: (0, 0)),     # Wg'   (resident bf16)
            pl.BlockSpec((cx, cn), lambda i: (0, 0)),     # Wx'   (resident bf16)
            pl.BlockSpec((1, cn), lambda i: (0, 0)),      # fused shift (+1 ch)
            pl.BlockSpec((cn, cx), lambda i: (0, 0)),     # psi scatter matrix S
        ],
        out_specs=pl.BlockSpec((tile, cx), lambda i: (i, 0)),
        compiler_params=pltpu.CompilerParams(
            dimension_semantics=("parallel",)),
        cost_estimate=cost,
    )(g2, x2, p["wg"], p["wx"], p["shift"], p["s"])

    if rows_p != rows:
        out = out[:rows]
    return out.reshape(n, h, w, fl)


# --------------------------------------------------------------------------
# Parameter init (PyTorch-like) + one-time offline folding / packing.
# --------------------------------------------------------------------------
def init_attention_params(key, f_g, f_l, f_int):
    ks = jax.random.split(key, 6)

    def conv1x1(k, cin, cout):
        kw, kb = jax.random.split(k)
        bound = 1.0 / float(cin) ** 0.5
        w = jax.random.uniform(kw, (cin, cout), jnp.float32, -bound, bound)
        b = jax.random.uniform(kb, (cout,), jnp.float32, -bound, bound)
        return w, b

    def bn(k, c):
        kg, kb, km, kv = jax.random.split(k, 4)
        gamma = jax.random.uniform(kg, (c,), jnp.float32, 0.5, 1.5)
        beta = jax.random.uniform(kb, (c,), jnp.float32, -0.1, 0.1)
        mean = jax.random.uniform(km, (c,), jnp.float32, -0.2, 0.2)
        var = jax.random.uniform(kv, (c,), jnp.float32, 0.5, 1.5)
        return gamma, beta, mean, var

    wg, bg = conv1x1(ks[0], f_g, f_int)
    gamma_g, beta_g, mean_g, var_g = bn(ks[1], f_int)
    wx, bx = conv1x1(ks[2], f_l, f_int)
    gamma_x, beta_x, mean_x, var_x = bn(ks[3], f_int)
    wpsi, bpsi = conv1x1(ks[4], f_int, 1)
    gamma_p, beta_p, mean_p, var_p = bn(ks[5], 1)
    return dict(wg=wg, bg=bg, gamma_g=gamma_g, beta_g=beta_g, mean_g=mean_g, var_g=var_g,
                wx=wx, bx=bx, gamma_x=gamma_x, beta_x=beta_x, mean_x=mean_x, var_x=var_x,
                wpsi=wpsi, bpsi=bpsi, gamma_p=gamma_p, beta_p=beta_p, mean_p=mean_p,
                var_p=var_p)


def prepare_params(raw, eps=1e-5):
    """Fold BN (explicit running stats, inference mode) into the conv weights,
    fuse biases, build block-diagonal lane-dense weights + psi scatter matrix,
    cast the MXU weights to bf16.  Done ONCE outside the jitted forward."""
    f_g, f_int = raw["wg"].shape
    f_l = raw["wx"].shape[0]
    pack = _pack_factor(f_l)
    nip = _round_up(f_int + 1, max(8, 128 // pack))   # +1 spare const-1 channel

    sg = raw["gamma_g"] / jnp.sqrt(raw["var_g"] + eps)
    sx = raw["gamma_x"] / jnp.sqrt(raw["var_x"] + eps)
    sp = raw["gamma_p"] / jnp.sqrt(raw["var_p"] + eps)

    wg_f = raw["wg"] * sg[None, :]
    wx_f = raw["wx"] * sx[None, :]
    shift = ((raw["bg"] - raw["mean_g"]) * sg + raw["beta_g"]
             + (raw["bx"] - raw["mean_x"]) * sx + raw["beta_x"])       # (f_int,)
    wpsi_f = raw["wpsi"][:, 0] * sp[0]                                 # (f_int,)
    psi_shift = (raw["bpsi"][0] - raw["mean_p"][0]) * sp[0] + raw["beta_p"][0]

    cg, cx, cn = pack * f_g, pack * f_l, pack * nip
    wg_t = jnp.zeros((cg, cn), jnp.float32)
    wx_t = jnp.zeros((cx, cn), jnp.float32)
    shift_t = jnp.zeros((1, cn), jnp.float32)
    s_t = jnp.zeros((cn, cx), jnp.float32)
    for j in range(pack):  # block-diagonal placement, one block per packed pixel
        wg_t = wg_t.at[j * f_g:(j + 1) * f_g, j * nip:j * nip + f_int].set(wg_f)
        wx_t = wx_t.at[j * f_l:(j + 1) * f_l, j * nip:j * nip + f_int].set(wx_f)
        shift_t = shift_t.at[0, j * nip:j * nip + f_int].set(shift)
        shift_t = shift_t.at[0, j * nip + f_int].set(1.0)              # const-1 ch
        s_t = s_t.at[j * nip:j * nip + f_int,
                     j * f_l:(j + 1) * f_l].set(wpsi_f[:, None])
        s_t = s_t.at[j * nip + f_int, j * f_l:(j + 1) * f_l].set(psi_shift)

    return dict(wg=wg_t.astype(jnp.bfloat16),
                wx=wx_t.astype(jnp.bfloat16),
                shift=shift_t,
                s=s_t)


# --------------------------------------------------------------------------
# Pure-JAX f32 reference (unfused, unfolded) for validation.
# --------------------------------------------------------------------------
def reference_forward(g, x, raw, eps=1e-5):
    def bn(y, gamma, beta, mean, var):
        return (y - mean) / jnp.sqrt(var + eps) * gamma + beta

    g1 = bn(jnp.einsum("nhwc,cf->nhwf", g, raw["wg"]) + raw["bg"],
            raw["gamma_g"], raw["beta_g"], raw["mean_g"], raw["var_g"])
    x1 = bn(jnp.einsum("nhwc,cf->nhwf", x, raw["wx"]) + raw["bx"],
            raw["gamma_x"], raw["beta_x"], raw["mean_x"], raw["var_x"])
    h = jnp.maximum(g1 + x1, 0.0)
    psi = bn(jnp.einsum("nhwf,fo->nhwo", h, raw["wpsi"]) + raw["bpsi"],
             raw["gamma_p"], raw["beta_p"], raw["mean_p"], raw["var_p"])
    return x * jax.nn.sigmoid(psi)


# --------------------------------------------------------------------------
if __name__ == "__main__":
    key = jax.random.PRNGKey(0)
    kp, kg, kx = jax.random.split(key, 3)

    # Small shapes consistent with AttentionBlock(F_g=32, F_l=32, F_int=16).
    N, H, W = 2, 16, 16
    F_g, F_l, F_int = 32, 32, 16

    raw = init_attention_params(kp, F_g, F_l, F_int)
    params = prepare_params(raw)           # offline: fold BN, pack, bf16 weights

    g_nchw = jax.random.normal(kg, (N, F_g, H, W), jnp.float32)
    x_nchw = jax.random.normal(kx, (N, F_l, H, W), jnp.float32)
    g_nhwc = jnp.transpose(g_nchw, (0, 2, 3, 1))
    x_nhwc = jnp.transpose(x_nchw, (0, 2, 3, 1))

    fwd = jax.jit(attention_block_forward)
    out_nhwc = fwd(g_nhwc, x_nhwc, params)
    jax.block_until_ready(out_nhwc)
    out_nchw = jnp.transpose(out_nhwc, (0, 3, 1, 2))

    ref_nchw = jnp.transpose(reference_forward(g_nhwc, x_nhwc, raw), (0, 3, 1, 2))

    assert out_nchw.shape == (N, F_l, H, W)
    assert bool(jnp.all(jnp.isfinite(out_nchw)))
    err = float(jnp.max(jnp.abs(out_nchw - ref_nchw)))
    assert err < 5e-2, f"max abs err vs f32 reference: {err}"
    print("KERNEL_OK")
</pallas_src>

<mosaic_0001>
module attributes {stable_mosaic.version = 11 : i64} {
  func.func @_attention_block_kernel(%arg0: i32, %arg1: memref<128x128xf32, #tpu.memory_space<vmem>>, %arg2: memref<128x128xf32, #tpu.memory_space<vmem>>, %arg3: memref<128x128xbf16, #tpu.memory_space<vmem>>, %arg4: memref<128x128xbf16, #tpu.memory_space<vmem>>, %arg5: memref<1x128xf32, #tpu.memory_space<vmem>>, %arg6: memref<128x128xf32, #tpu.memory_space<vmem>>, %arg7: memref<128x128xf32, #tpu.memory_space<vmem>>) attributes {dimension_semantics = [#tpu.dimension_semantics<parallel>], iteration_bounds = array<i64: 1>, scalar_prefetch = 0 : i64, scratch_operands = 0 : i64, tpu.core_type = #tpu.core_type<tc>, window_params = [{transform_indices = @transform_0, window_bounds = array<i64: 128, 128>}, {transform_indices = @transform_1, window_bounds = array<i64: 128, 128>}, {pipeline_mode = #tpu.pipeline_mode<synchronous>, transform_indices = @transform_2, window_bounds = array<i64: 128, 128>}, {pipeline_mode = #tpu.pipeline_mode<synchronous>, transform_indices = @transform_3, window_bounds = array<i64: 128, 128>}, {pipeline_mode = #tpu.pipeline_mode<synchronous>, transform_indices = @transform_4, window_bounds = array<i64: 1, 128>}, {pipeline_mode = #tpu.pipeline_mode<synchronous>, transform_indices = @transform_5, window_bounds = array<i64: 128, 128>}, {transform_indices = @transform_6, window_bounds = array<i64: 128, 128>}]} {
    %c0 = arith.constant 0 : index
    %c0_0 = arith.constant 0 : index
    %0 = vector.load %arg2[%c0, %c0_0] : memref<128x128xf32, #tpu.memory_space<vmem>>, vector<128x128xf32>
    %c0_1 = arith.constant 0 : index
    %c0_2 = arith.constant 0 : index
    %1 = vector.load %arg1[%c0_1, %c0_2] : memref<128x128xf32, #tpu.memory_space<vmem>>, vector<128x128xf32>
    %2 = arith.truncf %1 : vector<128x128xf32> to vector<128x128xbf16>
    %c0_3 = arith.constant 0 : index
    %c0_4 = arith.constant 0 : index
    %3 = vector.load %arg3[%c0_3, %c0_4] : memref<128x128xbf16, #tpu.memory_space<vmem>>, vector<128x128xbf16>
    %cst = arith.constant dense<0.000000e+00> : vector<128x128xf32>
    %4 = tpu.matmul %2, %3, %cst {dimension_numbers = #tpu.dot_dimension_numbers<[1], [0], [0], [1], [0, 0, 1, 1], [], []>} : vector<128x128xbf16>, vector<128x128xbf16>, vector<128x128xf32> -> vector<128x128xf32>
    %5 = arith.truncf %0 : vector<128x128xf32> to vector<128x128xbf16>
    %c0_5 = arith.constant 0 : index
    %c0_6 = arith.constant 0 : index
    %6 = vector.load %arg4[%c0_5, %c0_6] : memref<128x128xbf16, #tpu.memory_space<vmem>>, vector<128x128xbf16>
    %cst_7 = arith.constant dense<0.000000e+00> : vector<128x128xf32>
    %7 = tpu.matmul %5, %6, %cst_7 {dimension_numbers = #tpu.dot_dimension_numbers<[1], [0], [0], [1], [0, 0, 1, 1], [], []>} : vector<128x128xbf16>, vector<128x128xbf16>, vector<128x128xf32> -> vector<128x128xf32>
    %8 = arith.addf %4, %7 : vector<128x128xf32>
    %c0_8 = arith.constant 0 : index
    %c0_9 = arith.constant 0 : index
    %9 = vector.load %arg5[%c0_8, %c0_9] : memref<1x128xf32, #tpu.memory_space<vmem>>, vector<1x128xf32>
    %10 = vector.broadcast %9 : vector<1x128xf32> to vector<128x128xf32>
    %11 = arith.addf %8, %10 : vector<128x128xf32>
    %cst_10 = arith.constant 0.000000e+00 : f32
    %12 = vector.broadcast %cst_10 : f32 to vector<128x128xf32>
    %13 = arith.maximumf %11, %12 : vector<128x128xf32>
    %c0_11 = arith.constant 0 : index
    %c0_12 = arith.constant 0 : index
    %14 = vector.load %arg6[%c0_11, %c0_12] : memref<128x128xf32, #tpu.memory_space<vmem>>, vector<128x128xf32>
    %cst_13 = arith.constant dense<0.000000e+00> : vector<128x128xf32>
    %15 = tpu.matmul %13, %14, %cst_13 {dimension_numbers = #tpu.dot_dimension_numbers<[1], [0], [0], [1], [0, 0, 1, 1], [], []>} : vector<128x128xf32>, vector<128x128xf32>, vector<128x128xf32> -> vector<128x128xf32>
    %16 = arith.negf %15 : vector<128x128xf32>
    %17 = math.exp %16 : vector<128x128xf32>
    %cst_14 = arith.constant 1.000000e+00 : f32
    %18 = vector.broadcast %cst_14 : f32 to vector<128x128xf32>
    %19 = arith.addf %18, %17 : vector<128x128xf32>
    %20 = arith.divf %18, %19 : vector<128x128xf32>
    %21 = arith.mulf %0, %20 : vector<128x128xf32>
    %c0_15 = arith.constant 0 : index
    %c0_16 = arith.constant 0 : index
    %22 = vector.load %arg7[%c0_15, %c0_16] : memref<128x128xf32, #tpu.memory_space<vmem>>, vector<128x128xf32>
    tpu.vector_store %arg7[%c0_15, %c0_16], %21 {strides = array<i32>} : memref<128x128xf32, #tpu.memory_space<vmem>>, vector<128x128xf32>,
    return
  }
  func.func @transform_0(%arg0: i32) -> (i32, i32) {
    %c0_i32 = arith.constant 0 : i32
    %c0_i32_0 = arith.constant 0 : i32
    return %arg0, %c0_i32 : i32, i32
  }
  func.func @transform_1(%arg0: i32) -> (i32, i32) {
    %c0_i32 = arith.constant 0 : i32
    %c0_i32_0 = arith.constant 0 : i32
    return %arg0, %c0_i32 : i32, i32
  }
  func.func @transform_2(%arg0: i32) -> (i32, i32) {
    %c0_i32 = arith.constant 0 : i32
    %c0_i32_0 = arith.constant 0 : i32
    %c0_i32_1 = arith.constant 0 : i32
    return %c0_i32, %c0_i32_0 : i32, i32
  }
  func.func @transform_3(%arg0: i32) -> (i32, i32) {
    %c0_i32 = arith.constant 0 : i32
    %c0_i32_0 = arith.constant 0 : i32
    %c0_i32_1 = arith.constant 0 : i32
    return %c0_i32, %c0_i32_0 : i32, i32
  }
  func.func @transform_4(%arg0: i32) -> (i32, i32) {
    %c0_i32 = arith.constant 0 : i32
    %c0_i32_0 = arith.constant 0 : i32
    %c0_i32_1 = arith.constant 0 : i32
    return %c0_i32, %c0_i32_0 : i32, i32
  }
  func.func @transform_5(%arg0: i32) -> (i32, i32) {
    %c0_i32 = arith.constant 0 : i32
    %c0_i32_0 = arith.constant 0 : i32
    %c0_i32_1 = arith.constant 0 : i32
    return %c0_i32, %c0_i32_0 : i32, i32
  }
  func.func @transform_6(%arg0: i32) -> (i32, i32) {
    %c0_i32 = arith.constant 0 : i32
    %c0_i32_0 = arith.constant 0 : i32
    return %arg0, %c0_i32 : i32, i32
  }
}

</mosaic_0001>

<llo_original>
// kernel: attention_block_forward.1
$region0: #{attention_block_forward.1}
  #allocation0 [shape = 'u32[]', space=smem, size = 0x4, offset = 0x4, fixed_abs, tag = 'smem constant byte address 0x4 - core index']
  #allocation1 [shape = 'u32[144,128]{1,0:T(1,128)}', space=vmem, size = 0x12000, scoped, tag = 'internal scratch']
  %s0 = inlined_call_operand.vmem [shape: f32[128,128], index: 0, kind: input, shape index: {}]
  %s1 = inlined_call_operand.vmem [shape: f32[128,128], index: 1, kind: input, shape index: {}]
  %s2 = inlined_call_operand.vmem [shape: bf16[128,128], index: 2, kind: input, shape index: {}]
  %s3 = inlined_call_operand.vmem [shape: bf16[128,128], index: 3, kind: input, shape index: {}]
  %s4 = inlined_call_operand.vmem [shape: f32[1,128], index: 4, kind: input, shape index: {}]
  %s5 = inlined_call_operand.vmem [shape: f32[128,128], index: 5, kind: input, shape index: {}]
  %s6 = inlined_call_operand.vmem [shape: f32[128,128], index: 6, kind: output, shape index: {}]
  %s7 = sld [smem:[#allocation0]]
  $region34: #{attention_block_forward.1} parent=0
    _
  %s9 = ssub.s32 1, %s7
  %s10 = scalar_select 0, %s9, %s7
  // Predicated region
  $region2: #{attention_block_forward.1} parent=0 // pred_check
    _
  $region3: #{attention_block_forward.1} parent=0 // pred_check_branch
    %12 = sbr.rel (0) target = $region5
  $region4: #{attention_block_forward.1} parent=0 // pred_region
    _
  $region5: #{attention_block_forward.1} parent=0 // pred_fallthru
    _
  // Predicated region
  $region6: #{attention_block_forward.1} parent=0 // pred_check
    _
  $region7: #{attention_block_forward.1} parent=0 // pred_check_branch
    %14 = sbr.rel (0) target = $region9
  $region8: #{attention_block_forward.1} parent=0 // pred_region
    _
  $region9: #{attention_block_forward.1} parent=0 // pred_fallthru
    _
  // Predicated region
  $region10: #{attention_block_forward.1} parent=0 // pred_check
    _
  $region11: #{attention_block_forward.1} parent=0 // pred_check_branch
    %16 = sbr.rel (0) target = $region13
  $region12: #{attention_block_forward.1} parent=0 // pred_region
    _
  $region13: #{attention_block_forward.1} parent=0 // pred_fallthru
    _
  // Predicated region
  $region14: #{attention_block_forward.1} parent=0 // pred_check
    _
  $region15: #{attention_block_forward.1} parent=0 // pred_check_branch
    %18 = sbr.rel (0) target = $region17
  $region16: #{attention_block_forward.1} parent=0 // pred_region
    _
  $region17: #{attention_block_forward.1} parent=0 // pred_fallthru
    _
  // Predicated region
  $region18: #{attention_block_forward.1} parent=0 // pred_check
    _
  $region19: #{attention_block_forward.1} parent=0 // pred_check_branch
    %20 = sbr.rel (0) target = $region21
  $region20: #{attention_block_forward.1} parent=0 // pred_region
    _
  $region21: #{attention_block_forward.1} parent=0 // pred_fallthru
    _
  // Predicated region
  $region22: #{attention_block_forward.1} parent=0 // pred_check
    _
  $region23: #{attention_block_forward.1} parent=0 // pred_check_branch
    %22 = sbr.rel (0) target = $region25
  $region24: #{attention_block_forward.1} parent=0 // pred_region
    _
  $region25: #{attention_block_forward.1} parent=0 // pred_fallthru
    _
  %v24 = vld [vmem:[%s1] sm:$0xff]
  %v25 = vld [vmem:[%s1 + $0x8] sm:$0xff]
  %v26 = vld [vmem:[%s1 + $0x10] sm:$0xff]
  %v27 = vld [vmem:[%s1 + $0x18] sm:$0xff]
  %v28 = vld [vmem:[%s1 + $0x20] sm:$0xff]
  %v29 = vld [vmem:[%s1 + $0x28] sm:$0xff]
  %v30 = vld [vmem:[%s1 + $0x30] sm:$0xff]
  %v31 = vld [vmem:[%s1 + $0x38] sm:$0xff]
  %v32 = vld [vmem:[%s1 + $0x40] sm:$0xff]
  %v33 = vld [vmem:[%s1 + $0x48] sm:$0xff]
  %v34 = vld [vmem:[%s1 + $0x50] sm:$0xff]
  %v35 = vld [vmem:[%s1 + $0x58] sm:$0xff]
  %v36 = vld [vmem:[%s1 + $0x60] sm:$0xff]
  %v37 = vld [vmem:[%s1 + $0x68] sm:$0xff]
  %v38 = vld [vmem:[%s1 + $0x70] sm:$0xff]
  %v39 = vld [vmem:[%s1 + $0x78] sm:$0xff]
  %v40 = vld [vmem:[%s0] sm:$0xff]
  %v41 = vld [vmem:[%s0 + $0x8] sm:$0xff]
  %v42 = vld [vmem:[%s0 + $0x10] sm:$0xff]
  %v43 = vld [vmem:[%s0 + $0x18] sm:$0xff]
  %v44 = vld [vmem:[%s0 + $0x20] sm:$0xff]
  %v45 = vld [vmem:[%s0 + $0x28] sm:$0xff]
  %v46 = vld [vmem:[%s0 + $0x30] sm:$0xff]
  %v47 = vld [vmem:[%s0 + $0x38] sm:$0xff]
  %v48 = vld [vmem:[%s0 + $0x40] sm:$0xff]
  %v49 = vld [vmem:[%s0 + $0x48] sm:$0xff]
  %v50 = vld [vmem:[%s0 + $0x50] sm:$0xff]
  %v51 = vld [vmem:[%s0 + $0x58] sm:$0xff]
  %v52 = vld [vmem:[%s0 + $0x60] sm:$0xff]
  %v53 = vld [vmem:[%s0 + $0x68] sm:$0xff]
  %v54 = vld [vmem:[%s0 + $0x70] sm:$0xff]
  %v55 = vld [vmem:[%s0 + $0x78] sm:$0xff]
  %v56 = vpack.c.bf16 %v41, %v40
  %v57 = vpack.c.bf16 %v43, %v42
  %v58 = vpack.c.bf16 %v45, %v44
  %v59 = vpack.c.bf16 %v47, %v46
  %v60 = vpack.c.bf16 %v49, %v48
  %v61 = vpack.c.bf16 %v51, %v50
  %v62 = vpack.c.bf16 %v53, %v52
  %v63 = vpack.c.bf16 %v55, %v54
  %v64 = vld [vmem:[%s2] sm:$0xf]
  %v65 = vld [vmem:[%s2 + $0x4] sm:$0xf]
  %v66 = vld [vmem:[%s2 + $0x8] sm:$0xf]
  %v67 = vld [vmem:[%s2 + $0xc] sm:$0xf]
  %v68 = vld [vmem:[%s2 + $0x10] sm:$0xf]
  %v69 = vld [vmem:[%s2 + $0x14] sm:$0xf]
  %v70 = vld [vmem:[%s2 + $0x18] sm:$0xf]
  %v71 = vld [vmem:[%s2 + $0x1c] sm:$0xf]
  %v72 = vld [vmem:[%s2 + $0x20] sm:$0xf]
  %v73 = vld [vmem:[%s2 + $0x24] sm:$0xf]
  %v74 = vld [vmem:[%s2 + $0x28] sm:$0xf]
  %v75 = vld [vmem:[%s2 + $0x2c] sm:$0xf]
  %v76 = vld [vmem:[%s2 + $0x30] sm:$0xf]
  %v77 = vld [vmem:[%s2 + $0x34] sm:$0xf]
  %v78 = vld [vmem:[%s2 + $0x38] sm:$0xf]
  %v79 = vld [vmem:[%s2 + $0x3c] sm:$0xf]
  %v80 = vpack.c.bf16 %v25, %v24
  %v81 = vpack.c.bf16 %v27, %v26
  %v82 = vpack.c.bf16 %v29, %v28
  %v83 = vpack.c.bf16 %v31, %v30
  %v84 = vpack.c.bf16 %v33, %v32
  %v85 = vpack.c.bf16 %v35, %v34
  %v86 = vpack.c.bf16 %v37, %v36
  %v87 = vpack.c.bf16 %v39, %v38
  %v88 = vld [vmem:[%s3] sm:$0xf]
  %v89 = vld [vmem:[%s3 + $0x4] sm:$0xf]
  %v90 = vld [vmem:[%s3 + $0x8] sm:$0xf]
  %v91 = vld [vmem:[%s3 + $0xc] sm:$0xf]
  %v92 = vld [vmem:[%s3 + $0x10] sm:$0xf]
  %v93 = vld [vmem:[%s3 + $0x14] sm:$0xf]
  %v94 = vld [vmem:[%s3 + $0x18] sm:$0xf]
  %v95 = vld [vmem:[%s3 + $0x1c] sm:$0xf]
  %v96 = vld [vmem:[%s3 + $0x20] sm:$0xf]
  %v97 = vld [vmem:[%s3 + $0x24] sm:$0xf]
  %v98 = vld [vmem:[%s3 + $0x28] sm:$0xf]
  %v99 = vld [vmem:[%s3 + $0x2c] sm:$0xf]
  %v100 = vld [vmem:[%s3 + $0x30] sm:$0xf]
  %v101 = vld [vmem:[%s3 + $0x34] sm:$0xf]
  %v102 = vld [vmem:[%s3 + $0x38] sm:$0xf]
  %v103 = vld [vmem:[%s3 + $0x3c] sm:$0xf]
  %v120 = vunpack.c.l.b16 %v88
  %v121 = vunpack.c.l.b16 %v89
  %v122 = vunpack.c.l.b16 %v90
  %v123 = vunpack.c.l.b16 %v91
  %v124 = vunpack.c.l.b16 %v92
  %v125 = vunpack.c.l.b16 %v93
  %v126 = vunpack.c.l.b16 %v94
  %v127 = vunpack.c.l.b16 %v95
  %v128 = vunpack.c.l.b16 %v96
  %v129 = vunpack.c.l.b16 %v97
  %v130 = vunpack.c.l.b16 %v98
  %v131 = vunpack.c.l.b16 %v99
  %v132 = vunpack.c.l.b16 %v100
  %v133 = vunpack.c.l.b16 %v101
  %v134 = vunpack.c.l.b16 %v102
  %v135 = vunpack.c.l.b16 %v103
  %v136 = vpack.c.b16 %v121, %v120
  %v137 = vpack.c.b16 %v123, %v122
  %v138 = vpack.c.b16 %v125, %v124
  %v139 = vpack.c.b16 %v127, %v126
  %v140 = vpack.c.b16 %v129, %v128
  %v141 = vpack.c.b16 %v131, %v130
  %v142 = vpack.c.b16 %v133, %v132
  %v143 = vpack.c.b16 %v135, %v134
  %152 = vmatprep.subr.bf16.mxu0 0
  %153 = vmatpush1.bf16.msra.mxu0 %v136
  %154 = vmatprep.subr.bf16.mxu0 0
  %155 = vmatpush1.bf16.msra.mxu0 %v137
  %156 = vmatprep.subr.bf16.mxu0 0
  %157 = vmatpush1.bf16.msra.mxu0 %v138
  %158 = vmatprep.subr.bf16.mxu0 0
  %159 = vmatpush1.bf16.msra.mxu0 %v139
  %160 = vmatprep.subr.bf16.mxu0 0
  %161 = vmatpush1.bf16.msra.mxu0 %v140
  %162 = vmatprep.subr.bf16.mxu0 0
  %163 = vmatpush1.bf16.msra.mxu0 %v141
  %164 = vmatprep.subr.bf16.mxu0 0
  %165 = vmatpush1.bf16.msra.mxu0 %v142
  %166 = vmatprep.subr.bf16.mxu0 0
  %167 = vmatpush1.bf16.msra.mxu0 %v143
  %168 = vmatprep.subr.bf16.mxu0 0
  %169 = vmatpush1.bf16.msra.mxu0 0
  %170 = vmatprep.subr.bf16.mxu0 0
  %171 = vmatpush1.bf16.msra.mxu0 0
  %172 = vmatprep.subr.bf16.mxu0 0
  %173 = vmatpush1.bf16.msra.mxu0 0
  %174 = vmatprep.subr.bf16.mxu0 0
  %175 = vmatpush1.bf16.msra.mxu0 0
  %176 = vmatprep.subr.bf16.mxu0 0
  %177 = vmatpush1.bf16.msra.mxu0 0
  %178 = vmatprep.subr.bf16.mxu0 0
  %179 = vmatpush1.bf16.msra.mxu0 0
  %180 = vmatprep.subr.bf16.mxu0 0
  %181 = vmatpush1.bf16.msra.mxu0 0
  %182 = vmatprep.subr.bf16.mxu0 0
  %183 = vmatpush1.bf16.msra.mxu0 0
  %184 = vmatprep.mubr.bf16.mxu0 0
  %185 = vmatmul.mubr.bf16.gmra.mrb[0].mxu0 %v80
  %v186 = vpop.f32.mrb[0].mxu0
  %v187 = vadd.f32 0.0, %v186
  %v188 = vpop.f32.mrb[0].mxu0
  %v189 = vpop.f32.mrb[0].mxu0
  %v190 = vadd.f32 0.0, %v189
  %v191 = vpop.f32.mrb[0].mxu0
  %192 = vmatprep.mubr.bf16.mxu0 0
  %193 = vmatmul.mubr.bf16.gmra.mrb[0].mxu0 %v81
  %v194 = vpop.f32.mrb[0].mxu0
  %v195 = vadd.f32 0.0, %v194
  %v196 = vpop.f32.mrb[0].mxu0
  %v197 = vpop.f32.mrb[0].mxu0
  %v198 = vadd.f32 0.0, %v197
  %v199 = vpop.f32.mrb[0].mxu0
  %200 = vmatprep.mubr.bf16.mxu0 0
  %201 = vmatmul.mubr.bf16.gmra.mrb[0].mxu0 %v82
  %v202 = vpop.f32.mrb[0].mxu0
  %v203 = vadd.f32 0.0, %v202
  %v204 = vpop.f32.mrb[0].mxu0
  %v205 = vpop.f32.mrb[0].mxu0
  %v206 = vadd.f32 0.0, %v205
  %v207 = vpop.f32.mrb[0].mxu0
  %208 = vmatprep.mubr.bf16.mxu0 0
  %209 = vmatmul.mubr.bf16.gmra.mrb[0].mxu0 %v83
  %v210 = vpop.f32.mrb[0].mxu0
  %v211 = vadd.f32 0.0, %v210
  %v212 = vpop.f32.mrb[0].mxu0
  %v213 = vpop.f32.mrb[0].mxu0
  %v214 = vadd.f32 0.0, %v213
  %v215 = vpop.f32.mrb[0].mxu0
  %216 = vmatprep.mubr.bf16.mxu0 0
  %217 = vmatmul.mubr.bf16.gmra.mrb[0].mxu0 %v84
  %v218 = vpop.f32.mrb[0].mxu0
  %v219 = vadd.f32 0.0, %v218
  %v220 = vpop.f32.mrb[0].mxu0
  %v221 = vpop.f32.mrb[0].mxu0
  %v222 = vadd.f32 0.0, %v221
  %v223 = vpop.f32.mrb[0].mxu0
  %224 = vmatprep.mubr.bf16.mxu0 0
  %225 = vmatmul.mubr.bf16.gmra.mrb[0].mxu0 %v85
  %v226 = vpop.f32.mrb[0].mxu0
  %v227 = vadd.f32 0.0, %v226
  %v228 = vpop.f32.mrb[0].mxu0
  %v229 = vpop.f32.mrb[0].mxu0
  %v230 = vadd.f32 0.0, %v229
  %v231 = vpop.f32.mrb[0].mxu0
  %232 = vmatprep.mubr.bf16.mxu0 0
  %233 = vmatmul.mubr.bf16.gmra.mrb[0].mxu0 %v86
  %v234 = vpop.f32.mrb[0].mxu0
  %v235 = vadd.f32 0.0, %v234
  %v236 = vpop.f32.mrb[0].mxu0
  %v237 = vpop.f32.mrb[0].mxu0
  %v238 = vadd.f32 0.0, %v237
  %v239 = vpop.f32.mrb[0].mxu0
  %240 = vmatprep.mubr.bf16.mxu0 0
  %241 = vmatmul.mubr.bf16.gmra.mrb[0].mxu0 %v87
  %v242 = vpop.f32.mrb[0].mxu0
  %v243 = vadd.f32 0.0, %v242
  %v244 = vpop.f32.mrb[0].mxu0
  %v245 = vpop.f32.mrb[0].mxu0
  %v246 = vadd.f32 0.0, %v245
  %v247 = vpop.f32.mrb[0].mxu0
  %248 = vdwg.mxu0
  %v265 = vunpack.c.l.b16 %v64
  %v266 = vunpack.c.l.b16 %v65
  %v267 = vunpack.c.l.b16 %v66
  %v268 = vunpack.c.l.b16 %v67
  %v269 = vunpack.c.l.b16 %v68
  %v270 = vunpack.c.l.b16 %v69
  %v271 = vunpack.c.l.b16 %v70
  %v272 = vunpack.c.l.b16 %v71
  %v273 = vunpack.c.l.b16 %v72
  %v274 = vunpack.c.l.b16 %v73
  %v275 = vunpack.c.l.b16 %v74
  %v276 = vunpack.c.l.b16 %v75
  %v277 = vunpack.c.l.b16 %v76
  %v278 = vunpack.c.l.b16 %v77
  %v279 = vunpack.c.l.b16 %v78
  %v280 = vunpack.c.l.b16 %v79
  %v281 = vpack.c.b16 %v266, %v265
  %v282 = vpack.c.b16 %v268, %v267
  %v283 = vpack.c.b16 %v270, %v269
  %v284 = vpack.c.b16 %v272, %v271
  %v285 = vpack.c.b16 %v274, %v273
  %v286 = vpack.c.b16 %v276, %v275
  %v287 = vpack.c.b16 %v278, %v277
  %v288 = vpack.c.b16 %v280, %v279
  %297 = vmatprep.subr.bf16.mxu0 0
  %298 = vmatpush1.bf16.msra.mxu0 %v281
  %299 = vmatprep.subr.bf16.mxu0 0
  %300 = vmatpush1.bf16.msra.mxu0 %v282
  %301 = vmatprep.subr.bf16.mxu0 0
  %302 = vmatpush1.bf16.msra.mxu0 %v283
  %303 = vmatprep.subr.bf16.mxu0 0
  %304 = vmatpush1.bf16.msra.mxu0 %v284
  %305 = vmatprep.subr.bf16.mxu0 0
  %306 = vmatpush1.bf16.msra.mxu0 %v285
  %307 = vmatprep.subr.bf16.mxu0 0
  %308 = vmatpush1.bf16.msra.mxu0 %v286
  %309 = vmatprep.subr.bf16.mxu0 0
  %310 = vmatpush1.bf16.msra.mxu0 %v287
  %311 = vmatprep.subr.bf16.mxu0 0
  %312 = vmatpush1.bf16.msra.mxu0 %v288
  %313 = vmatprep.subr.bf16.mxu0 0
  %314 = vmatpush1.bf16.msra.mxu0 0
  %315 = vmatprep.subr.bf16.mxu0 0
  %316 = vmatpush1.bf16.msra.mxu0 0
  %317 = vmatprep.subr.bf16.mxu0 0
  %318 = vmatpush1.bf16.msra.mxu0 0
  %319 = vmatprep.subr.bf16.mxu0 0
  %320 = vmatpush1.bf16.msra.mxu0 0
  %321 = vmatprep.subr.bf16.mxu0 0
  %322 = vmatpush1.bf16.msra.mxu0 0
  %323 = vmatprep.subr.bf16.mxu0 0
  %324 = vmatpush1.bf16.msra.mxu0 0
  %325 = vmatprep.subr.bf16.mxu0 0
  %326 = vmatpush1.bf16.msra.mxu0 0
  %327 = vmatprep.subr.bf16.mxu0 0
  %328 = vmatpush1.bf16.msra.mxu0 0
  %329 = vmatprep.mubr.bf16.mxu0 0
  %330 = vmatmul.mubr.bf16.gmra.mrb[0].mxu0 %v56
  %v331 = vpop.f32.mrb[0].mxu0
  %v332 = vadd.f32 %v187, %v331
  %v333 = vpop.f32.mrb[0].mxu0
  %v334 = vpop.f32.mrb[0].mxu0
  %v335 = vadd.f32 %v190, %v334
  %v336 = vpop.f32.mrb[0].mxu0
  %337 = vmatprep.mubr.bf16.mxu0 0
  %338 = vmatmul.mubr.bf16.gmra.mrb[0].mxu0 %v57
  %v339 = vpop.f32.mrb[0].mxu0
  %v340 = vadd.f32 %v195, %v339
  %v341 = vpop.f32.mrb[0].mxu0
  %v342 = vpop.f32.mrb[0].mxu0
  %v343 = vadd.f32 %v198, %v342
  %v344 = vpop.f32.mrb[0].mxu0
  %345 = vmatprep.mubr.bf16.mxu0 0
  %346 = vmatmul.mubr.bf16.gmra.mrb[0].mxu0 %v58
  %v347 = vpop.f32.mrb[0].mxu0
  %v348 = vadd.f32 %v203, %v347
  %v349 = vpop.f32.mrb[0].mxu0
  %v350 = vpop.f32.mrb[0].mxu0
  %v351 = vadd.f32 %v206, %v350
  %v352 = vpop.f32.mrb[0].mxu0
  %353 = vmatprep.mubr.bf16.mxu0 0
  %354 = vmatmul.mubr.bf16.gmra.mrb[0].mxu0 %v59
  %v355 = vpop.f32.mrb[0].mxu0
  %v356 = vadd.f32 %v211, %v355
  %v357 = vpop.f32.mrb[0].mxu0
  %v358 = vpop.f32.mrb[0].mxu0
  %v359 = vadd.f32 %v214, %v358
  %v360 = vpop.f32.mrb[0].mxu0
  %361 = vmatprep.mubr.bf16.mxu0 0
  %362 = vmatmul.mubr.bf16.gmra.mrb[0].mxu0 %v60
  %v363 = vpop.f32.mrb[0].mxu0
  %v364 = vadd.f32 %v219, %v363
  %v365 = vpop.f32.mrb[0].mxu0
  %v366 = vpop.f32.mrb[0].mxu0
  %v367 = vadd.f32 %v222, %v366
  %v368 = vpop.f32.mrb[0].mxu0
  %369 = vmatprep.mubr.bf16.mxu0 0
  %370 = vmatmul.mubr.bf16.gmra.mrb[0].mxu0 %v61
  %v371 = vpop.f32.mrb[0].mxu0
  %v372 = vadd.f32 %v227, %v371
  %v373 = vpop.f32.mrb[0].mxu0
  %v374 = vpop.f32.mrb[0].mxu0
  %v375 = vadd.f32 %v230, %v374
  %v376 = vpop.f32.mrb[0].mxu0
  %377 = vmatprep.mubr.bf16.mxu0 0
  %378 = vmatmul.mubr.bf16.gmra.mrb[0].mxu0 %v62
  %v379 = vpop.f32.mrb[0].mxu0
  %v380 = vadd.f32 %v235, %v379
  %v381 = vpop.f32.mrb[0].mxu0
  %v382 = vpop.f32.mrb[0].mxu0
  %v383 = vadd.f32 %v238, %v382
  %v384 = vpop.f32.mrb[0].mxu0
  %385 = vmatprep.mubr.bf16.mxu0 0
  %386 = vmatmul.mubr.bf16.gmra.mrb[0].mxu0 %v63
  %v387 = vpop.f32.mrb[0].mxu0
  %v388 = vadd.f32 %v243, %v387
  %v389 = vpop.f32.mrb[0].mxu0
  %v390 = vpop.f32.mrb[0].mxu0
  %v391 = vadd.f32 %v246, %v390
  %v392 = vpop.f32.mrb[0].mxu0
  %393 = vdwg.mxu0
  %v394 = vld [vmem:[%s4] sm:$0x1]
  %v396 = vlaneseq
  %v397 = vshrl.u32 %v396, 7
  %v398 = vsub.s32 0, %v397
  %v399 = vrot.slane %v394, %v398
  %v401 = vadd.f32 %v332, %v399
  %v402 = vadd.f32 %v335, %v399
  %v403 = vadd.f32 %v340, %v399
  %v404 = vadd.f32 %v343, %v399
  %v405 = vadd.f32 %v348, %v399
  %v406 = vadd.f32 %v351, %v399
  %v407 = vadd.f32 %v356, %v399
  %v408 = vadd.f32 %v359, %v399
  %v409 = vadd.f32 %v364, %v399
  %v410 = vadd.f32 %v367, %v399
  %v411 = vadd.f32 %v372, %v399
  %v412 = vadd.f32 %v375, %v399
  %v413 = vadd.f32 %v380, %v399
  %v414 = vadd.f32 %v383, %v399
  %v415 = vadd.f32 %v388, %v399
  %v416 = vadd.f32 %v391, %v399
  %v417 = vmax.f32 %v401, 0.0
  %v418 = vmax.f32 %v402, 0.0
  %v419 = vmax.f32 %v403, 0.0
  %v420 = vmax.f32 %v404, 0.0
  %v421 = vmax.f32 %v405, 0.0
  %v422 = vmax.f32 %v406, 0.0
  %v423 = vmax.f32 %v407, 0.0
  %v424 = vmax.f32 %v408, 0.0
  %v425 = vmax.f32 %v409, 0.0
  %v426 = vmax.f32 %v410, 0.0
  %v427 = vmax.f32 %v411, 0.0
  %v428 = vmax.f32 %v412, 0.0
  %v429 = vmax.f32 %v413, 0.0
  %v430 = vmax.f32 %v414, 0.0
  %v431 = vmax.f32 %v415, 0.0
  %v432 = vmax.f32 %v416, 0.0
  %v433 = vld [vmem:[%s5] sm:$0xff]
  %v434 = vld [vmem:[%s5 + $0x8] sm:$0xff]
  %v435 = vld [vmem:[%s5 + $0x10] sm:$0xff]
  %v436 = vld [vmem:[%s5 + $0x18] sm:$0xff]
  %v437 = vld [vmem:[%s5 + $0x20] sm:$0xff]
  %v438 = vld [vmem:[%s5 + $0x28] sm:$0xff]
  %v439 = vld [vmem:[%s5 + $0x30] sm:$0xff]
  %v440 = vld [vmem:[%s5 + $0x38] sm:$0xff]
  %v441 = vld [vmem:[%s5 + $0x40] sm:$0xff]
  %v442 = vld [vmem:[%s5 + $0x48] sm:$0xff]
  %v443 = vld [vmem:[%s5 + $0x50] sm:$0xff]
  %v444 = vld [vmem:[%s5 + $0x58] sm:$0xff]
  %v445 = vld [vmem:[%s5 + $0x60] sm:$0xff]
  %v446 = vld [vmem:[%s5 + $0x68] sm:$0xff]
  %v447 = vld [vmem:[%s5 + $0x70] sm:$0xff]
  %v448 = vld [vmem:[%s5 + $0x78] sm:$0xff]
  %449 = vmatprep.subr.mxu0 0.0
  %450 = vmatpush1.msra.mxu0 %v433
  %451 = vmatprep.subr.mxu0 0.0
  %452 = vmatpush1.msra.mxu0 %v434
  %453 = vmatprep.subr.mxu0 0.0
  %454 = vmatpush1.msra.mxu0 %v435
  %455 = vmatprep.subr.mxu0 0.0
  %456 = vmatpush1.msra.mxu0 %v436
  %457 = vmatprep.subr.mxu0 0.0
  %458 = vmatpush1.msra.mxu0 %v437
  %459 = vmatprep.subr.mxu0 0.0
  %460 = vmatpush1.msra.mxu0 %v438
  %461 = vmatprep.subr.mxu0 0.0
  %462 = vmatpush1.msra.mxu0 %v439
  %463 = vmatprep.subr.mxu0 0.0
  %464 = vmatpush1.msra.mxu0 %v440
  %465 = vmatprep.subr.mxu0 0.0
  %466 = vmatpush1.msra.mxu0 %v441
  %467 = vmatprep.subr.mxu0 0.0
  %468 = vmatpush1.msra.mxu0 %v442
  %469 = vmatprep.subr.mxu0 0.0
  %470 = vmatpush1.msra.mxu0 %v443
  %471 = vmatprep.subr.mxu0 0.0
  %472 = vmatpush1.msra.mxu0 %v444
  %473 = vmatprep.subr.mxu0 0.0
  %474 = vmatpush1.msra.mxu0 %v445
  %475 = vmatprep.subr.mxu0 0.0
  %476 = vmatpush1.msra.mxu0 %v446
  %477 = vmatprep.subr.mxu0 0.0
  %478 = vmatpush1.msra.mxu0 %v447
  %479 = vmatprep.subr.mxu0 0.0
  %480 = vmatpush1.msra.mxu0 %v448
  %481 = vmatprep.subr.mxu0 0.0
  %482 = vmatpush1.msra.mxu0 0.0
  %483 = vmatprep.subr.mxu0 0.0
  %484 = vmatpush1.msra.mxu0 0.0
  %485 = vmatprep.subr.mxu0 0.0
  %486 = vmatpush1.msra.mxu0 0.0
  %487 = vmatprep.subr.mxu0 0.0
  %488 = vmatpush1.msra.mxu0 0.0
  %489 = vmatprep.subr.mxu0 0.0
  %490 = vmatpush1.msra.mxu0 0.0
  %491 = vmatprep.subr.mxu0 0.0
  %492 = vmatpush1.msra.mxu0 0.0
  %493 = vmatprep.subr.mxu0 0.0
  %494 = vmatpush1.msra.mxu0 0.0
  %495 = vmatprep.subr.mxu0 0.0
  %496 = vmatpush1.msra.mxu0 0.0
  %497 = vmatprep.subr.mxu0 0.0
  %498 = vmatpush1.msra.mxu0 0.0
  %499 = vmatprep.subr.mxu0 0.0
  %500 = vmatpush1.msra.mxu0 0.0
  %501 = vmatprep.subr.mxu0 0.0
  %502 = vmatpush1.msra.mxu0 0.0
  %503 = vmatprep.subr.mxu0 0.0
  %504 = vmatpush1.msra.mxu0 0.0
  %505 = vmatprep.subr.mxu0 0.0
  %506 = vmatpush1.msra.mxu0 0.0
  %507 = vmatprep.subr.mxu0 0.0
  %508 = vmatpush1.msra.mxu0 0.0
  %509 = vmatprep.subr.mxu0 0.0
  %510 = vmatpush1.msra.mxu0 0.0
  %511 = vmatprep.subr.mxu0 0.0
  %512 = vmatpush1.msra.mxu0 0.0
  %513 = vmatprep.mubr.f32.mxu0 0.0
  %514 = vmatmul.mubr.f32.gmra.mrb[0].mxu0 %v417
  %v515 = vpop.f32.mrb[0].mxu0
  %v516 = vadd.f32 0.0, %v515
  %v517 = vpop.f32.mrb[0].mxu0
  %518 = vmatprep.mubr.f32.mxu0 0.0
  %519 = vmatmul.mubr.f32.gmra.mrb[0].mxu0 %v418
  %v520 = vpop.f32.mrb[0].mxu0
  %v521 = vadd.f32 0.0, %v520
  %v522 = vpop.f32.mrb[0].mxu0
  %523 = vmatprep.mubr.f32.mxu0 0.0
  %524 = vmatmul.mubr.f32.gmra.mrb[0].mxu0 %v419
  %v525 = vpop.f32.mrb[0].mxu0
  %v526 = vadd.f32 0.0, %v525
  %v527 = vpop.f32.mrb[0].mxu0
  %528 = vmatprep.mubr.f32.mxu0 0.0
  %529 = vmatmul.mubr.f32.gmra.mrb[0].mxu0 %v420
  %v530 = vpop.f32.mrb[0].mxu0
  %v531 = vadd.f32 0.0, %v530
  %v532 = vpop.f32.mrb[0].mxu0
  %533 = vmatprep.mubr.f32.mxu0 0.0
  %534 = vmatmul.mubr.f32.gmra.mrb[0].mxu0 %v421
  %v535 = vpop.f32.mrb[0].mxu0
  %v536 = vadd.f32 0.0, %v535
  %v537 = vpop.f32.mrb[0].mxu0
  %538 = vmatprep.mubr.f32.mxu0 0.0
  %539 = vmatmul.mubr.f32.gmra.mrb[0].mxu0 %v422
  %v540 = vpop.f32.mrb[0].mxu0
  %v541 = vadd.f32 0.0, %v540
  %v542 = vpop.f32.mrb[0].mxu0
  %543 = vmatprep.mubr.f32.mxu0 0.0
  %544 = vmatmul.mubr.f32.gmra.mrb[0].mxu0 %v423
  %v545 = vpop.f32.mrb[0].mxu0
  %v546 = vadd.f32 0.0, %v545
  %v547 = vpop.f32.mrb[0].mxu0
  %548 = vmatprep.mubr.f32.mxu0 0.0
  %549 = vmatmul.mubr.f32.gmra.mrb[0].mxu0 %v424
  %v550 = vpop.f32.mrb[0].mxu0
  %v551 = vadd.f32 0.0, %v550
  %v552 = vpop.f32.mrb[0].mxu0
  %553 = vmatprep.mubr.f32.mxu0 0.0
  %554 = vmatmul.mubr.f32.gmra.mrb[0].mxu0 %v425
  %v555 = vpop.f32.mrb[0].mxu0
  %v556 = vadd.f32 0.0, %v555
  %v557 = vpop.f32.mrb[0].mxu0
  %558 = vmatprep.mubr.f32.mxu0 0.0
  %559 = vmatmul.mubr.f32.gmra.mrb[0].mxu0 %v426
  %v560 = vpop.f32.mrb[0].mxu0
  %v561 = vadd.f32 0.0, %v560
  %v562 = vpop.f32.mrb[0].mxu0
  %563 = vmatprep.mubr.f32.mxu0 0.0
  %564 = vmatmul.mubr.f32.gmra.mrb[0].mxu0 %v427
  %v565 = vpop.f32.mrb[0].mxu0
  %v566 = vadd.f32 0.0, %v565
  %v567 = vpop.f32.mrb[0].mxu0
  %568 = vmatprep.mubr.f32.mxu0 0.0
  %569 = vmatmul.mubr.f32.gmra.mrb[0].mxu0 %v428
  %v570 = vpop.f32.mrb[0].mxu0
  %v571 = vadd.f32 0.0, %v570
  %v572 = vpop.f32.mrb[0].mxu0
  %573 = vmatprep.mubr.f32.mxu0 0.0
  %574 = vmatmul.mubr.f32.gmra.mrb[0].mxu0 %v429
  %v575 = vpop.f32.mrb[0].mxu0
  %v576 = vadd.f32 0.0, %v575
  %v577 = vpop.f32.mrb[0].mxu0
  %578 = vmatprep.mubr.f32.mxu0 0.0
  %579 = vmatmul.mubr.f32.gmra.mrb[0].mxu0 %v430
  %v580 = vpop.f32.mrb[0].mxu0
  %v581 = vadd.f32 0.0, %v580
  %v582 = vpop.f32.mrb[0].mxu0
  %583 = vmatprep.mubr.f32.mxu0 0.0
  %584 = vmatmul.mubr.f32.gmra.mrb[0].mxu0 %v431
  %v585 = vpop.f32.mrb[0].mxu0
  %v586 = vadd.f32 0.0, %v585
  %v587 = vpop.f32.mrb[0].mxu0
  %588 = vmatprep.mubr.f32.mxu0 0.0
  %589 = vmatmul.mubr.f32.gmra.mrb[0].mxu0 %v432
  %v590 = vpop.f32.mrb[0].mxu0
  %v591 = vadd.f32 0.0, %v590
  %v592 = vpop.f32.mrb[0].mxu0
  %593 = vdwg.mxu0
  %v594 = vxor.u32 %v516, 2147483648
  %v595 = vxor.u32 %v521, 2147483648
  %v596 = vxor.u32 %v526, 2147483648
  %v597 = vxor.u32 %v531, 2147483648
  %v598 = vxor.u32 %v536, 2147483648
  %v599 = vxor.u32 %v541, 2147483648
  %v600 = vxor.u32 %v546, 2147483648
  %v601 = vxor.u32 %v551, 2147483648
  %v602 = vxor.u32 %v556, 2147483648
  %v603 = vxor.u32 %v561, 2147483648
  %v604 = vxor.u32 %v566, 2147483648
  %v605 = vxor.u32 %v571, 2147483648
  %v606 = vxor.u32 %v576, 2147483648
  %v607 = vxor.u32 %v581, 2147483648
  %v608 = vxor.u32 %v586, 2147483648
  %v609 = vxor.u32 %v591, 2147483648
  %v610 = vmul.f32 %v594, 1.442695
  %v611 = vpow.pop %v610
  %v612 = vmul.f32 %v595, 1.442695
  %v613 = vpow.pop %v612
  %v614 = vmul.f32 %v596, 1.442695
  %v615 = vpow.pop %v614
  %v616 = vmul.f32 %v597, 1.442695
  %v617 = vpow.pop %v616
  %v618 = vmul.f32 %v598, 1.442695
  %v619 = vpow.pop %v618
  %v620 = vmul.f32 %v599, 1.442695
  %v621 = vpow.pop %v620
  %v622 = vmul.f32 %v600, 1.442695
  %v623 = vpow.pop %v622
  %v624 = vmul.f32 %v601, 1.442695
  %v625 = vpow.pop %v624
  %v626 = vmul.f32 %v602, 1.442695
  %v627 = vpow.pop %v626
  %v628 = vmul.f32 %v603, 1.442695
  %v629 = vpow.pop %v628
  %v630 = vmul.f32 %v604, 1.442695
  %v631 = vpow.pop %v630
  %v632 = vmul.f32 %v605, 1.442695
  %v633 = vpow.pop %v632
  %v634 = vmul.f32 %v606, 1.442695
  %v635 = vpow.pop %v634
  %v636 = vmul.f32 %v607, 1.442695
  %v637 = vpow.pop %v636
  %v638 = vmul.f32 %v608, 1.442695
  %v639 = vpow.pop %v638
  %v640 = vmul.f32 %v609, 1.442695
  %v641 = vpow.pop %v640
  %v642 = vadd.f32 %v611, 1.0
  %v643 = vadd.f32 %v613, 1.0
  %v644 = vadd.f32 %v615, 1.0
  %v645 = vadd.f32 %v617, 1.0
  %v646 = vadd.f32 %v619, 1.0
  %v647 = vadd.f32 %v621, 1.0
  %v648 = vadd.f32 %v623, 1.0
  %v649 = vadd.f32 %v625, 1.0
  %v650 = vadd.f32 %v627, 1.0
  %v651 = vadd.f32 %v629, 1.0
  %v652 = vadd.f32 %v631, 1.0
  %v653 = vadd.f32 %v633, 1.0
  %v654 = vadd.f32 %v635, 1.0
  %v655 = vadd.f32 %v637, 1.0
  %v656 = vadd.f32 %v639, 1.0
  %v657 = vadd.f32 %v641, 1.0
  %v658 = vrcp.pop %v642
  %v659 = vmul.f32 1.0, %v658
  %v660 = vrcp.pop %v643
  %v661 = vmul.f32 1.0, %v660
  %v662 = vrcp.pop %v644
  %v663 = vmul.f32 1.0, %v662
  %v664 = vrcp.pop %v645
  %v665 = vmul.f32 1.0, %v664
  %v666 = vrcp.pop %v646
  %v667 = vmul.f32 1.0, %v666
  %v668 = vrcp.pop %v647
  %v669 = vmul.f32 1.0, %v668
  %v670 = vrcp.pop %v648
  %v671 = vmul.f32 1.0, %v670
  %v672 = vrcp.pop %v649
  %v673 = vmul.f32 1.0, %v672
  %v674 = vrcp.pop %v650
  %v675 = vmul.f32 1.0, %v674
  %v676 = vrcp.pop %v651
  %v677 = vmul.f32 1.0, %v676
  %v678 = vrcp.pop %v652
  %v679 = vmul.f32 1.0, %v678
  %v680 = vrcp.pop %v653
  %v681 = vmul.f32 1.0, %v680
  %v682 = vrcp.pop %v654
  %v683 = vmul.f32 1.0, %v682
  %v684 = vrcp.pop %v655
  %v685 = vmul.f32 1.0, %v684
  %v686 = vrcp.pop %v656
  %v687 = vmul.f32 1.0, %v686
  %v688 = vrcp.pop %v657
  %v689 = vmul.f32 1.0, %v688
  %v690 = vmul.f32 %v24, %v659
  %v691 = vmul.f32 %v25, %v661
  %v692 = vmul.f32 %v26, %v663
  %v693 = vmul.f32 %v27, %v665
  %v694 = vmul.f32 %v28, %v667
  %v695 = vmul.f32 %v29, %v669
  %v696 = vmul.f32 %v30, %v671
  %v697 = vmul.f32 %v31, %v673
  %v698 = vmul.f32 %v32, %v675
  %v699 = vmul.f32 %v33, %v677
  %v700 = vmul.f32 %v34, %v679
  %v701 = vmul.f32 %v35, %v681
  %v702 = vmul.f32 %v36, %v683
  %v703 = vmul.f32 %v37, %v685
  %v704 = vmul.f32 %v38, %v687
  %v705 = vmul.f32 %v39, %v689
  %706 = vst [vmem:[%s6] sm:$0xff] %v690
  %707 = vst [vmem:[%s6 + $0x8] sm:$0xff] %v691
  %708 = vst [vmem:[%s6 + $0x10] sm:$0xff] %v692
  %709 = vst [vmem:[%s6 + $0x18] sm:$0xff] %v693
  %710 = vst [vmem:[%s6 + $0x20] sm:$0xff] %v694
  %711 = vst [vmem:[%s6 + $0x28] sm:$0xff] %v695
  %712 = vst [vmem:[%s6 + $0x30] sm:$0xff] %v696
  %713 = vst [vmem:[%s6 + $0x38] sm:$0xff] %v697
  %714 = vst [vmem:[%s6 + $0x40] sm:$0xff] %v698
  %715 = vst [vmem:[%s6 + $0x48] sm:$0xff] %v699
  %716 = vst [vmem:[%s6 + $0x50] sm:$0xff] %v700
  %717 = vst [vmem:[%s6 + $0x58] sm:$0xff] %v701
  %718 = vst [vmem:[%s6 + $0x60] sm:$0xff] %v702
  %719 = vst [vmem:[%s6 + $0x68] sm:$0xff] %v703
  %720 = vst [vmem:[%s6 + $0x70] sm:$0xff] %v704
  %721 = vst [vmem:[%s6 + $0x78] sm:$0xff] %v705
  // Predicated region
  $region26: #{attention_block_forward.1} parent=0 // pred_check
    _
  $region27: #{attention_block_forward.1} parent=0 // pred_check_branch
    %723 = sbr.rel (0) target = $region29
  $region28: #{attention_block_forward.1} parent=0 // pred_region
    _
  $region29: #{attention_block_forward.1} parent=0 // pred_fallthru
    _
  // Predicated region
  $region30: #{attention_block_forward.1} parent=0 // pred_check
    _
  $region31: #{attention_block_forward.1} parent=0 // pred_check_branch
    %725 = sbr.rel (0) target = $region33
  $region32: #{attention_block_forward.1} parent=0 // pred_region
    _
  $region33: #{attention_block_forward.1} parent=0 // pred_fallthru
    _

</llo_original>
